<compile_context>
chip_gen: v7x
topology: tpu7x:2x2x1
jax: 0.10.0
libtpu: 0.0.40
codegen_flags: <defaults>
</compile_context>

<pallas_src>
import numpy as np
import jax
import jax.numpy as jnp
from jax.experimental import pallas as pl
from jax.experimental.pallas import tpu as pltpu


# ----------------------------------------------------------------------------
# Host-side (deterministic) construction of the pre-transposed CWT operator,
# mirroring pywt.cwt(..., 'morl', method='conv') exactly.
# ----------------------------------------------------------------------------
def _morlet_int_psi(precision=10):
    """pywt.integrate_wavelet(ContinuousWavelet('morl'), precision=10)."""
    length = 2 ** precision
    xg = np.linspace(-8.0, 8.0, length)          # morl support [-8, 8]
    psi = np.exp(-xg ** 2 / 2.0) * np.cos(5.0 * xg)
    step = xg[1] - xg[0]
    int_psi = np.cumsum(psi) * step
    # pywt casts int_psi to the data dtype (float32) before use
    return int_psi.astype(np.float32), xg


def _int_psi_scale(scale, int_psi, xg):
    """The per-scale resampled/reversed integrated wavelet used by pywt.cwt."""
    step = xg[1] - xg[0]
    j = np.arange(scale * (xg[-1] - xg[0]) + 1) / (scale * step)
    j = j.astype(int)
    if j[-1] >= int_psi.size:
        j = np.extract(j < int_psi.size, j)
    return int_psi[j][::-1]


def build_cwt_weight_t(scales, N, dtype=np.float32):
    """Pre-transposed operator W2[m, s*N + n] so the kernel does plain x @ W2
    (contraction over the RHS *first* dim -> no on-chip transpose)."""
    int_psi, xg = _morlet_int_psi()
    S = len(scales)
    W = np.zeros((S, N, N), dtype=np.float64)    # W[s, n, m]
    n_idx = np.arange(N)[:, None]
    m_idx = np.arange(N)[None, :]
    for si, s in enumerate(scales):
        f = _int_psi_scale(s, int_psi, xg).astype(np.float64)
        M = f.size
        # full conv length N+M-1, diff -> N+M-2, centered trim keeps N samples
        off = int(np.floor((M - 2) / 2.0))

        def gather(idx):
            valid = (idx >= 0) & (idx < M)
            return np.where(valid, f[np.clip(idx, 0, M - 1)], 0.0)

        k0 = n_idx + off - m_idx
        W[si] = -np.sqrt(s) * (gather(k0 + 1) - gather(k0))
    # (S, n, m) -> (m, S, n) -> (m, S*n)
    W2 = np.ascontiguousarray(np.transpose(W, (2, 0, 1)).reshape(N, S * N))
    return W2.astype(dtype)


# ----------------------------------------------------------------------------
# Pallas kernel: K-tiled MXU matmul with f32 VMEM accumulator + fused abs.
#   o[b, j] = | sum_m x[b, m] * w[m, j] |
# grid = (scale_tiles [parallel], k_tiles [arbitrary/reduction, last])
# ----------------------------------------------------------------------------
def _wt_matmul_abs_kernel(x_ref, w_ref, o_ref, acc_ref):
    k = pl.program_id(1)

    @pl.when(k == 0)
    def _():
        acc_ref[...] = jnp.zeros_like(acc_ref)

    # W may be streamed as bf16 (halves HBM traffic); upcast in VMEM and keep
    # the f32 MXU accumulate.
    w = w_ref[...].astype(jnp.float32)
    acc_ref[...] += jnp.dot(x_ref[...], w, preferred_element_type=jnp.float32)

    @pl.when(k == pl.num_programs(1) - 1)
    def _():
        o_ref[...] = jnp.abs(acc_ref[...]).astype(o_ref.dtype)


# ----------------------------------------------------------------------------
# Tiling heuristics.
# ----------------------------------------------------------------------------
def _default_vmem_budget_bytes():
    """Per-generation double-buffer budget: ~64 MiB on v5e/v6e (128 MiB
    physical VMEM), ~24 MiB on v7x (64 MiB physical)."""
    try:
        cap = getattr(pltpu.get_tpu_info(), "vmem_capacity_bytes", None)
    except Exception:
        cap = None
    if cap is None:
        return 24 << 20                       # safe everywhere
    if cap <= (64 << 20):                     # v7x-class
        return 24 << 20
    return 64 << 20                           # v5e / v6e


def _vmem_need(ts, tk, S, N, Bp, w_isz, x_isz, o_isz):
    return (2 * tk * ts * N * w_isz           # W blocks (double-buffered)
            + 2 * Bp * tk * x_isz             # x blocks
            + 2 * Bp * ts * N * o_isz         # out blocks
            + Bp * ts * N * 4)                # f32 accumulator scratch


def _choose_tiles(S, N, Bp, w_isz, x_isz, o_isz, budget):
    """Pick (scales_per_step, k_tile).  Preferences, in order:
       1. >=2 steps along the parallel scale axis (v7x megacore),
       2. ts*N a multiple of 256 (full MXU result columns on v6e/v7x),
       3. largest ts, then largest tk, that fit the VMEM budget."""
    ts_cands = [ts for ts in range(S, 0, -1)
                if S % ts == 0 and (ts == S or (ts * N) % 128 == 0)]
    tk_cands = [tk for tk in range(N, 0, -1)
                if N % tk == 0 and (tk == N or tk % 128 == 0)]
    best = None
    for ts in ts_cands:
        for tk in tk_cands:                   # descending: largest tk that fits
            if _vmem_need(ts, tk, S, N, Bp, w_isz, x_isz, o_isz) > budget:
                continue
            score = (S // ts >= 2, (ts * N) % 256 == 0, ts, tk)
            if best is None or score > best[0]:
                best = (score, ts, tk)
            break
    if best is None:
        # Nothing fits the budget: smallest legal blocks; vmem_limit_bytes is
        # stretched to cover them by the caller.
        return ts_cands[-1], tk_cands[-1]
    return best[1], best[2]


# ----------------------------------------------------------------------------
# Wrapper.
# ----------------------------------------------------------------------------
def wt_embedding_pallas(x, W2, emb_size, *, out_dtype=jnp.float32,
                        vmem_budget_bytes=None):
    """x: (B, N) f32, W2: (N, S*N) pre-transposed weights (f32 or bf16)
       ->  (B, S, N) out_dtype, |CWT| per scale (matches WTEmbedding.forward)."""
    B, N = x.shape
    S = emb_size
    assert W2.shape == (N, S * N), (W2.shape, (N, S * N))

    if vmem_budget_bytes is None:
        vmem_budget_bytes = _default_vmem_budget_bytes()

    # Pad the batch to a full 8-row sublane tile (x stays f32): unmasked
    # loads/stores and better MXU row utilization.
    Bp = max(8, ((B + 7) // 8) * 8)
    if Bp != B:
        x = jnp.concatenate([x, jnp.zeros((Bp - B, N), x.dtype)], axis=0)

    w_isz = jnp.dtype(W2.dtype).itemsize
    x_isz = jnp.dtype(x.dtype).itemsize
    o_isz = jnp.dtype(out_dtype).itemsize

    ts, tk = _choose_tiles(S, N, Bp, w_isz, x_isz, o_isz, vmem_budget_bytes)
    n_s = S // ts
    n_k = N // tk

    need = _vmem_need(ts, tk, S, N, Bp, w_isz, x_isz, o_isz)
    vmem_limit = min(max(vmem_budget_bytes, need) + (2 << 20), 128 << 20)

    cost = pl.CostEstimate(
        flops=int(2 * Bp * N * S * N),
        transcendentals=0,
        bytes_accessed=int(Bp * N * x_isz + N * S * N * w_isz
                           + Bp * S * N * o_isz),
    )

    out_flat = pl.pallas_call(
        _wt_matmul_abs_kernel,
        out_shape=jax.ShapeDtypeStruct((Bp, S * N), out_dtype),
        grid=(n_s, n_k),
        in_specs=[
            pl.BlockSpec((Bp, tk), lambda s, k: (0, k)),        # x: K-tiled
            pl.BlockSpec((tk, ts * N), lambda s, k: (k, s)),    # W: K x scales
        ],
        out_specs=pl.BlockSpec((Bp, ts * N), lambda s, k: (0, s)),
        scratch_shapes=[pltpu.VMEM((Bp, ts * N), jnp.float32)],
        compiler_params=pltpu.CompilerParams(
            dimension_semantics=("parallel", "arbitrary"),
            vmem_limit_bytes=int(vmem_limit)),
        cost_estimate=cost,
    )(x, W2)

    return out_flat.reshape(Bp, S, N)[:B]


# ----------------------------------------------------------------------------
# Pure-numpy reference mirroring pywt.cwt's conv path (for validation only).
# ----------------------------------------------------------------------------
def reference_cwt_abs(x_np, scales):
    B, N = x_np.shape
    int_psi, xg = _morlet_int_psi()
    out = np.empty((len(scales), B, N), dtype=np.float64)
    for si, s in enumerate(scales):
        f = _int_psi_scale(s, int_psi, xg).astype(np.float64)
        for b in range(B):
            conv = np.convolve(x_np[b].astype(np.float64), f)
            coef = -np.sqrt(s) * np.diff(conv)
            d = (coef.size - N) / 2.0
            if d > 0:
                coef = coef[int(np.floor(d)):-int(np.ceil(d))]
            out[si, b] = coef
    # torch.abs then transpose(0, 1)
    return np.abs(np.transpose(out, (1, 0, 2))).astype(np.float32)


if __name__ == "__main__":
    B, L, EMB = 2, 128, 8                          # small, module-consistent shapes
    key = jax.random.PRNGKey(0)
    x = jax.random.normal(key, (B, L), dtype=jnp.float32)

    scales = np.geomspace(1.0, 1000.0, num=EMB)    # as in __init__
    W2_f32 = build_cwt_weight_t(scales, L, dtype=np.float32)   # (L, EMB*L)

    ref = reference_cwt_abs(np.asarray(x), scales)

    # 1) f32 weight path: tight check against the pywt-equivalent reference.
    out_f32 = wt_embedding_pallas(x, jnp.asarray(W2_f32), EMB)
    out_f32 = jax.block_until_ready(out_f32)
    assert out_f32.shape == (B, EMB, L), out_f32.shape
    np.testing.assert_allclose(np.asarray(out_f32), ref, rtol=1e-3, atol=1e-3)

    # 2) bf16 weight path (default perf config: halves the HBM weight stream).
    #    bf16 weights carry ~4e-3 relative rounding, so validate at a
    #    bf16-appropriate tolerance.
    W2_bf16 = jnp.asarray(W2_f32, dtype=jnp.bfloat16)
    out_bf16w = wt_embedding_pallas(x, W2_bf16, EMB)
    out_bf16w = jax.block_until_ready(out_bf16w)
    assert out_bf16w.shape == (B, EMB, L), out_bf16w.shape
    atol_bf16 = 2e-2 * float(np.max(np.abs(ref)))
    np.testing.assert_allclose(np.asarray(out_bf16w), ref,
                               rtol=2e-2, atol=atol_bf16)

    print("KERNEL_OK")
</pallas_src>

<mosaic_0001>
module attributes {stable_mosaic.version = 11 : i64} {
  func.func @_wt_matmul_abs_kernel(%arg0: i32, %arg1: i32, %arg2: memref<8x128xf32, #tpu.memory_space<vmem>>, %arg3: memref<128x512xf32, #tpu.memory_space<vmem>>, %arg4: memref<8x512xf32, #tpu.memory_space<vmem>>, %arg5: memref<8x512xf32, #tpu.memory_space<vmem>>) attributes {dimension_semantics = [#tpu.dimension_semantics<parallel>, #tpu.dimension_semantics<arbitrary>], iteration_bounds = array<i64: 2, 1>, scalar_prefetch = 0 : i64, scratch_operands = 1 : i64, tpu.core_type = #tpu.core_type<tc>, window_params = [{transform_indices = @transform_0, window_bounds = array<i64: 8, 128>}, {transform_indices = @transform_1, window_bounds = array<i64: 128, 512>}, {transform_indices = @transform_2, window_bounds = array<i64: 8, 512>}]} {
    %c0_i32 = arith.constant 0 : i32
    %0 = arith.cmpi eq, %arg1, %c0_i32 : i32
    %1 = arith.extui %0 : i1 to i32
    %c0_i32_0 = arith.constant 0 : i32
    %2 = arith.cmpi ne, %1, %c0_i32_0 : i32
    scf.if %2 {
      %cst_10 = arith.constant 0.000000e+00 : f32
      %12 = vector.broadcast %cst_10 : f32 to vector<8x512xf32>
      %c0_11 = arith.constant 0 : index
      %c0_12 = arith.constant 0 : index
      %13 = vector.load %arg5[%c0_11, %c0_12] : memref<8x512xf32, #tpu.memory_space<vmem>>, vector<8x512xf32>
      tpu.vector_store %arg5[%c0_11, %c0_12], %12 {strides = array<i32>} : memref<8x512xf32, #tpu.memory_space<vmem>>, vector<8x512xf32>,
    } else {
    }
    %c0 = arith.constant 0 : index
    %c0_1 = arith.constant 0 : index
    %3 = vector.load %arg3[%c0, %c0_1] : memref<128x512xf32, #tpu.memory_space<vmem>>, vector<128x512xf32>
    %c0_2 = arith.constant 0 : index
    %c0_3 = arith.constant 0 : index
    %4 = vector.load %arg5[%c0_2, %c0_3] : memref<8x512xf32, #tpu.memory_space<vmem>>, vector<8x512xf32>
    %c0_4 = arith.constant 0 : index
    %c0_5 = arith.constant 0 : index
    %5 = vector.load %arg2[%c0_4, %c0_5] : memref<8x128xf32, #tpu.memory_space<vmem>>, vector<8x128xf32>
    %cst = arith.constant dense<0.000000e+00> : vector<8x512xf32>
    %6 = tpu.matmul %5, %3, %cst {dimension_numbers = #tpu.dot_dimension_numbers<[1], [0], [0], [1], [0, 0, 1, 1], [], []>} : vector<8x128xf32>, vector<128x512xf32>, vector<8x512xf32> -> vector<8x512xf32>
    %7 = arith.addf %4, %6 : vector<8x512xf32>
    %c0_6 = arith.constant 0 : index
    %c0_7 = arith.constant 0 : index
    %8 = vector.load %arg5[%c0_6, %c0_7] : memref<8x512xf32, #tpu.memory_space<vmem>>, vector<8x512xf32>
    tpu.vector_store %arg5[%c0_6, %c0_7], %7 {strides = array<i32>} : memref<8x512xf32, #tpu.memory_space<vmem>>, vector<8x512xf32>,
    %c0_i32_8 = arith.constant 0 : i32
    %9 = arith.cmpi eq, %arg1, %c0_i32_8 : i32
    %10 = arith.extui %9 : i1 to i32
    %c0_i32_9 = arith.constant 0 : i32
    %11 = arith.cmpi ne, %10, %c0_i32_9 : i32
    scf.if %11 {
      %c0_10 = arith.constant 0 : index
      %c0_11 = arith.constant 0 : index
      %12 = vector.load %arg5[%c0_10, %c0_11] : memref<8x512xf32, #tpu.memory_space<vmem>>, vector<8x512xf32>
      %13 = math.absf %12 : vector<8x512xf32>
      %c0_12 = arith.constant 0 : index
      %c0_13 = arith.constant 0 : index
      %14 = vector.load %arg4[%c0_12, %c0_13] : memref<8x512xf32, #tpu.memory_space<vmem>>, vector<8x512xf32>
      tpu.vector_store %arg4[%c0_12, %c0_13], %13 {strides = array<i32>} : memref<8x512xf32, #tpu.memory_space<vmem>>, vector<8x512xf32>,
    } else {
    }
    return
  }
  func.func @transform_0(%arg0: i32, %arg1: i32) -> (i32, i32) {
    %c0_i32 = arith.constant 0 : i32
    %c0_i32_0 = arith.constant 0 : i32
    return %c0_i32, %arg1 : i32, i32
  }
  func.func @transform_1(%arg0: i32, %arg1: i32) -> (i32, i32) {
    %c0_i32 = arith.constant 0 : i32
    return %arg1, %arg0 : i32, i32
  }
  func.func @transform_2(%arg0: i32, %arg1: i32) -> (i32, i32) {
    %c0_i32 = arith.constant 0 : i32
    %c0_i32_0 = arith.constant 0 : i32
    return %c0_i32, %arg0 : i32, i32
  }
}

</mosaic_0001>

<llo_original>
// kernel: tpu_custom_call.1
$region0: #{tpu_custom_call.1}
  #allocation0 [shape = 'u32[]', space=smem, size = 0x4, offset = 0x4, fixed_abs, tag = 'smem constant byte address 0x4 - core index']
  #allocation1 [shape = 'u32[144,128]{1,0:T(1,128)}', space=vmem, size = 0x12000, scoped, tag = 'internal scratch']
  #allocation2 [shape = 'f32[8,512]{1,0:T(8,128)}', space=vmem, size = 0x4000, scoped, tag = 'scratch operand']
  %s0 = inlined_call_operand.hbm [shape: f32[8,128], index: 0, kind: input, shape index: {}]
  %s1 = inlined_call_operand.hbm [shape: f32[128,1024], index: 1, kind: input, shape index: {}]
  %s2 = inlined_call_operand.hbm [shape: f32[8,1024], index: 2, kind: output, shape index: {}]
  %s3 = sld [smem:[#allocation0]]
  $region57: #{tpu_custom_call.1} parent=0
    _
  %s5 = ssub.s32 1, %s3
  %s6 = scalar_select 0, %s5, %s3
  $region1: #{tpu_custom_call.1} parent=0
    #allocation3 [shape = 'u8[4096]{0}', space=vmem, size = 0x1000, scoped, tag = 'input window, operand 0, single buffered']
    #allocation4 [shape = 's32[2]{0}', space=sflag, size = 0x8, scoped, tag = 'scoped memory for tpu_custom_call.1']
    #allocation5 [shape = 's32[2]{0}', space=sflag, size = 0x8, scoped, tag = 'scoped memory for tpu_custom_call.1']
    #allocation6 [shape = 'u8[524288]{0}', space=vmem, size = 0x80000, scoped, tag = 'input window, operand 1']
    #allocation7 [shape = 's32[2]{0}', space=sflag, size = 0x8, scoped, tag = 'scoped memory for tpu_custom_call.1']
    #allocation8 [shape = 'u8[32768]{0}', space=vmem, size = 0x8000, scoped, tag = 'output window, operand 0']
    %7 = vsyncpa [#allocation4], 0
    %8 = vsyncpa [#allocation7], 0
    %s9 = scalar_lea.sflag [#allocation7], 1
    %10 = vsyncpa %s9, 0
    %11 = vsyncpa [#allocation5], 0
    %s12 = scalar_lea.sflag [#allocation5], 1
    %13 = vsyncpa %s12, 0
    loop: start=0, step=1, limit=4
    $region2: #{tpu_custom_call.1} parent=1 // loop_pre_header
      _
    $region3: #{tpu_custom_call.1} parent=1 // loop_header
      %s15 = sphi 0, %s19
      %p16 = scmp.ge.s32.totalorder %s15, 4
      %s22 = sphi 0, %s34
      %s23 = sphi 0, %s30
      %s24 = sphi 0, %s22
      %s25 = sphi 0, %s23
      %s26 = sphi 0, %s24
      %s27 = sphi 0, %s25
      %s37 = sphi 0, %s39
      %s40 = sphi 0, %s37
      %s41 = sphi 0, %s40
      %s57 = sphi 0, %s41
      %s65 = sphi 0, %s67
      %s68 = sphi 0, %s65
      %s69 = sphi 0, %s68
      %s85 = sphi 0, %s69
      %s91 = sphi 0, %s93
      %s94 = sphi 0, %s91
      %s95 = sphi 0, %s94
      %s111 = sphi 0, %s95
    $region4: #{tpu_custom_call.1} parent=1 // loop_header_branch
      %18 = sbr.rel (%p16) target = $region8
    $region5: #{tpu_custom_call.1} parent=1 // loop_body
      %s20 = ssub.s32 %s15, 1
      %s21 = ssub.s32 %s15, 2
      %s28 = sadd.s32 1, %s23
      %p29 = scmp.ge.s32.totalorder %s28, 1
      %s30 = scalar_select %p29, 0, %s28
      %s31 = sadd.s32 1, %s22
      %s32 = scalar_select %p29, %s31, %s22
      %p33 = scmp.ge.s32.totalorder %s32, 2
      %s34 = scalar_select %p33, 0, %s32
      %s35 = ssub.s32 %s23, %s30
      %p36 = scmp.eq.s32.totalorder %s35, 0
      %s38 = sadd.s32 %s37, 1
      %s39 = scalar_select %p36, %s37, %s38
      %p42 = pneg %p36
      %p43 = scmp.eq.s32.totalorder %s15, 1
      %p44 = por %p42, %p43
      %p45 = scmp.ne.s32.totalorder %s37, %s40
      %p46 = scmp.eq.s32.totalorder %s15, 0
      %p47 = por %p45, %p46
      %p48 = scmp.ne.s32.totalorder %s37, %s40
      %p49 = scmp.eq.s32.totalorder %s20, 1
      %p50 = por %p48, %p49
      %p51 = scmp.ne.s32.totalorder %s40, %s41
      %p52 = scmp.eq.s32.totalorder %s20, 0
      %p53 = por %p51, %p52
      %p54 = scmp.ne.s32.totalorder %s40, %s41
      %p55 = scmp.eq.s32.totalorder %s21, 1
      %p56 = por %p54, %p55
      %p58 = scmp.ne.s32.totalorder %s41, %s57
      %p59 = scmp.eq.s32.totalorder %s21, 0
      %p60 = por %p58, %p59
      %s61 = ssub.s32 %s23, %s30
      %s62 = ssub.s32 %s22, %s34
      %s63 = sor.u32 %s61, %s62
      %p64 = scmp.eq.s32.totalorder %s63, 0
      %s66 = sadd.s32 %s65, 1
      %s67 = scalar_select %p64, %s65, %s66
      %p70 = pneg %p64
      %p71 = scmp.eq.s32.totalorder %s15, 1
      %p72 = por %p70, %p71
      %p73 = scmp.ne.s32.totalorder %s65, %s68
      %p74 = scmp.eq.s32.totalorder %s15, 0
      %p75 = por %p73, %p74
      %p76 = scmp.ne.s32.totalorder %s65, %s68
      %p77 = scmp.eq.s32.totalorder %s20, 1
      %p78 = por %p76, %p77
      %p79 = scmp.ne.s32.totalorder %s68, %s69
      %p80 = scmp.eq.s32.totalorder %s20, 0
      %p81 = por %p79, %p80
      %p82 = scmp.ne.s32.totalorder %s68, %s69
      %p83 = scmp.eq.s32.totalorder %s21, 1
      %p84 = por %p82, %p83
      %p86 = scmp.ne.s32.totalorder %s69, %s85
      %p87 = scmp.eq.s32.totalorder %s21, 0
      %p88 = por %p86, %p87
      %s89 = ssub.s32 %s22, %s34
      %p90 = scmp.eq.s32.totalorder %s89, 0
      %s92 = sadd.s32 %s91, 1
      %s93 = scalar_select %p90, %s91, %s92
      %p96 = pneg %p90
      %p97 = scmp.eq.s32.totalorder %s15, 1
      %p98 = por %p96, %p97
      %p99 = scmp.ne.s32.totalorder %s91, %s94
      %p100 = scmp.eq.s32.totalorder %s15, 0
      %p101 = por %p99, %p100
      %p102 = scmp.ne.s32.totalorder %s91, %s94
      %p103 = scmp.eq.s32.totalorder %s20, 1
      %p104 = por %p102, %p103
      %p105 = scmp.ne.s32.totalorder %s94, %s95
      %p106 = scmp.eq.s32.totalorder %s20, 0
      %p107 = por %p105, %p106
      %p108 = scmp.ne.s32.totalorder %s94, %s95
      %p109 = scmp.eq.s32.totalorder %s21, 1
      %p110 = por %p108, %p109
      %p112 = scmp.ne.s32.totalorder %s95, %s111
      %p113 = scmp.eq.s32.totalorder %s21, 0
      %p114 = por %p112, %p113
      %p115 = scmp.le.s32.totalorder 1, %s15
      %p116 = scmp.lt.s32.totalorder %s15, 3
      %p117 = pnand %p115, %p116
      %p118 = pneg %p117
      // Predicated region
      $region9: #{tpu_custom_call.1} parent=5 // pred_check
        _
      $region10: #{tpu_custom_call.1} parent=5 // pred_check_branch
        %120 = sbr.rel (%p117) target = $region12
      $region11: #{tpu_custom_call.1} parent=5 // pred_region
        %s121 = ssub.s32 %s15, 1
        // Predicated region
        $region13: #{tpu_custom_call.1} parent=11 // pred_check
          %p122 = pneg %p53
        $region14: #{tpu_custom_call.1} parent=11 // pred_check_branch
          %124 = sbr.rel (%p122) target = $region16
        $region15: #{tpu_custom_call.1} parent=11 // pred_region
          %s126 = ssub.s32 128, 128
          %127 = vsyncadd [#allocation4], %s126
          %s128 = smul.addr %s25, 128
          %s129 = scalar_lea.hbm %s0, %s128
          %s131 = sshll.u32 [#allocation3], 4
          %s132 = int_to_ptr.vmem [resolvable:$true] %s131
          %134 = dma.hbm_to_vmem [thread:$0]  %s129, 128, %s132, [#allocation4]
        $region16: #{tpu_custom_call.1} parent=11 // pred_fallthru
          _
      $region12: #{tpu_custom_call.1} parent=5 // pred_fallthru
        _
      %p135 = scmp.lt.s32.totalorder %s15, 2
      // Predicated region
      $region17: #{tpu_custom_call.1} parent=5 // pred_check
        %p136 = pneg %p135
      $region18: #{tpu_custom_call.1} parent=5 // pred_check_branch
        %138 = sbr.rel (%p136) target = $region20
      $region19: #{tpu_custom_call.1} parent=5 // pred_region
        // Predicated region
        $region21: #{tpu_custom_call.1} parent=19 // pred_check
          %p139 = pneg %p75
        $region22: #{tpu_custom_call.1} parent=19 // pred_check_branch
          %141 = sbr.rel (%p139) target = $region24
        $region23: #{tpu_custom_call.1} parent=19 // pred_region
          %s142 = sand.u32 %s65, 1
          %s143 = scalar_lea.sflag [#allocation7], %s142
          %s144 = sand.u32 %s65, 1
          %s145 = smul.addr %s144, 512
          %s146 = scalar_lea.vmem [#allocation6], %s145
          %s147 = smul.u32 16, %s23
          %s148 = smul.u32 4, %s22
          %s150 = ssub.s32 8192, 8192
          %151 = vsyncadd %s143, %s150
          %s152 = smul.addr %s147, 8
          %s153 = sadd.s32 %s148, %s152
          %s154 = smul.addr %s153, 128
          %s155 = scalar_lea.hbm %s1, %s154
          %s156 = sshll.u32 %s146, 4
          %s157 = int_to_ptr.vmem [resolvable:$true] %s156
          %162 = dma.hbm_to_vmem [thread:$0]  %s155, 8192, %s157, %s143, 1024, 512, 32
        $region24: #{tpu_custom_call.1} parent=19 // pred_fallthru
          _
      $region20: #{tpu_custom_call.1} parent=5 // pred_fallthru
        _
      %p163 = scmp.le.s32.totalorder 1, %s15
      %p164 = scmp.lt.s32.totalorder %s15, 3
      %p165 = pnand %p163, %p164
      %p166 = pneg %p165
      // Predicated region
      $region25: #{tpu_custom_call.1} parent=5 // pred_check
        _
      $region26: #{tpu_custom_call.1} parent=5 // pred_check_branch
        %168 = sbr.rel (%p165) target = $region28
      $region27: #{tpu_custom_call.1} parent=5 // pred_region
        %s169 = ssub.s32 %s15, 1
        // Predicated region
        $region29: #{tpu_custom_call.1} parent=27 // pred_check
          %p170 = pneg %p53
        $region30: #{tpu_custom_call.1} parent=27 // pred_check_branch
          %172 = sbr.rel (%p170) target = $region32
        $region31: #{tpu_custom_call.1} parent=27 // pred_region
          %173 = dma.done [#allocation4], 128
        $region32: #{tpu_custom_call.1} parent=27 // pred_fallthru
          _
        %s174 = sand.u32 %s68, 1
        %s175 = scalar_lea.sflag [#allocation7], %s174
        %s176 = sand.u32 %s68, 1
        %s177 = smul.addr %s176, 512
        %s178 = scalar_lea.vmem [#allocation6], %s177
        // Predicated region
        $region33: #{tpu_custom_call.1} parent=27 // pred_check
          %p179 = pneg %p81
        $region34: #{tpu_custom_call.1} parent=27 // pred_check_branch
          %181 = sbr.rel (%p179) target = $region36
        $region35: #{tpu_custom_call.1} parent=27 // pred_region
          %182 = dma.done %s175, 8192
        $region36: #{tpu_custom_call.1} parent=27 // pred_fallthru
          _
        %p183 = pneg %p53
        %p184 = pneg %p50
        %s185 = sand.u32 %s68, 1
        %s186 = scalar_lea.sflag [#allocation7], %s185
        %s187 = sand.u32 %s68, 1
        %s188 = smul.addr %s187, 512
        %s189 = scalar_lea.vmem [#allocation6], %s188
        %p190 = pneg %p81
        %p191 = pneg %p78
        %p192 = pneg %p107
        %p193 = pneg %p104
        %s194 = sand.u32 %s94, 1
        %s195 = scalar_lea.sflag [#allocation5], %s194
        %s196 = sand.u32 %s94, 1
        %s197 = smul.addr %s196, 32
        %s198 = scalar_lea.vmem [#allocation8], %s197
        %s199 = smul.u32 16, %s25
        %s200 = smul.u32 4, %s24
        %s201 = smul.u32 4, %s24
        %p202 = scmp.eq.s32.totalorder %s25, 0
        // Predicated region
        $region37: #{tpu_custom_call.1} parent=27 // pred_check
          %p203 = pneg %p202
        $region38: #{tpu_custom_call.1} parent=27 // pred_check_branch
          %205 = sbr.rel (%p203) target = $region40
        $region39: #{tpu_custom_call.1} parent=27 // pred_region
          %206 = vst [vmem:[#allocation2] sm:$0xff] 0.0
          %207 = vst [vmem:[#allocation2 + $0x8] sm:$0xff] 0.0
          %208 = vst [vmem:[#allocation2 + $0x10] sm:$0xff] 0.0
          %209 = vst [vmem:[#allocation2 + $0x18] sm:$0xff] 0.0
        $region40: #{tpu_custom_call.1} parent=27 // pred_fallthru
          _
        %v210 = vld [vmem:[%s178] sm:$0xff]
        %v211 = vld [vmem:[%s178 + $0x8] sm:$0xff]
        %v212 = vld [vmem:[%s178 + $0x10] sm:$0xff]
        %v213 = vld [vmem:[%s178 + $0x18] sm:$0xff]
        %v214 = vld [vmem:[%s178 + $0x20] sm:$0xff]
        %v215 = vld [vmem:[%s178 + $0x28] sm:$0xff]
        %v216 = vld [vmem:[%s178 + $0x30] sm:$0xff]
        %v217 = vld [vmem:[%s178 + $0x38] sm:$0xff]
        %v218 = vld [vmem:[%s178 + $0x40] sm:$0xff]
        %v219 = vld [vmem:[%s178 + $0x48] sm:$0xff]
        %v220 = vld [vmem:[%s178 + $0x50] sm:$0xff]
        %v221 = vld [vmem:[%s178 + $0x58] sm:$0xff]
        %v222 = vld [vmem:[%s178 + $0x60] sm:$0xff]
        %v223 = vld [vmem:[%s178 + $0x68] sm:$0xff]
        %v224 = vld [vmem:[%s178 + $0x70] sm:$0xff]
        %v225 = vld [vmem:[%s178 + $0x78] sm:$0xff]
        %v226 = vld [vmem:[%s178 + $0x80] sm:$0xff]
        %v227 = vld [vmem:[%s178 + $0x88] sm:$0xff]
        %v228 = vld [vmem:[%s178 + $0x90] sm:$0xff]
        %v229 = vld [vmem:[%s178 + $0x98] sm:$0xff]
        %v230 = vld [vmem:[%s178 + $0xa0] sm:$0xff]
        %v231 = vld [vmem:[%s178 + $0xa8] sm:$0xff]
        %v232 = vld [vmem:[%s178 + $0xb0] sm:$0xff]
        %v233 = vld [vmem:[%s178 + $0xb8] sm:$0xff]
        %v234 = vld [vmem:[%s178 + $0xc0] sm:$0xff]
        %v235 = vld [vmem:[%s178 + $0xc8] sm:$0xff]
        %v236 = vld [vmem:[%s178 + $0xd0] sm:$0xff]
        %v237 = vld [vmem:[%s178 + $0xd8] sm:$0xff]
        %v238 = vld [vmem:[%s178 + $0xe0] sm:$0xff]
        %v239 = vld [vmem:[%s178 + $0xe8] sm:$0xff]
        %v240 = vld [vmem:[%s178 + $0xf0] sm:$0xff]
        %v241 = vld [vmem:[%s178 + $0xf8] sm:$0xff]
        %v242 = vld [vmem:[%s178 + $0x100] sm:$0xff]
        %v243 = vld [vmem:[%s178 + $0x108] sm:$0xff]
        %v244 = vld [vmem:[%s178 + $0x110] sm:$0xff]
        %v245 = vld [vmem:[%s178 + $0x118] sm:$0xff]
        %v246 = vld [vmem:[%s178 + $0x120] sm:$0xff]
        %v247 = vld [vmem:[%s178 + $0x128] sm:$0xff]
        %v248 = vld [vmem:[%s178 + $0x130] sm:$0xff]
        %v249 = vld [vmem:[%s178 + $0x138] sm:$0xff]
        %v250 = vld [vmem:[%s178 + $0x140] sm:$0xff]
        %v251 = vld [vmem:[%s178 + $0x148] sm:$0xff]
        %v252 = vld [vmem:[%s178 + $0x150] sm:$0xff]
        %v253 = vld [vmem:[%s178 + $0x158] sm:$0xff]
        %v254 = vld [vmem:[%s178 + $0x160] sm:$0xff]
        %v255 = vld [vmem:[%s178 + $0x168] sm:$0xff]
        %v256 = vld [vmem:[%s178 + $0x170] sm:$0xff]
        %v257 = vld [vmem:[%s178 + $0x178] sm:$0xff]
        %v258 = vld [vmem:[%s178 + $0x180] sm:$0xff]
        %v259 = vld [vmem:[%s178 + $0x188] sm:$0xff]
        %v260 = vld [vmem:[%s178 + $0x190] sm:$0xff]
        %v261 = vld [vmem:[%s178 + $0x198] sm:$0xff]
        %v262 = vld [vmem:[%s178 + $0x1a0] sm:$0xff]
        %v263 = vld [vmem:[%s178 + $0x1a8] sm:$0xff]
        %v264 = vld [vmem:[%s178 + $0x1b0] sm:$0xff]
        %v265 = vld [vmem:[%s178 + $0x1b8] sm:$0xff]
        %v266 = vld [vmem:[%s178 + $0x1c0] sm:$0xff]
        %v267 = vld [vmem:[%s178 + $0x1c8] sm:$0xff]
        %v268 = vld [vmem:[%s178 + $0x1d0] sm:$0xff]
        %v269 = vld [vmem:[%s178 + $0x1d8] sm:$0xff]
        %v270 = vld [vmem:[%s178 + $0x1e0] sm:$0xff]
        %v271 = vld [vmem:[%s178 + $0x1e8] sm:$0xff]
        %v272 = vld [vmem:[%s178 + $0x1f0] sm:$0xff]
        %v273 = vld [vmem:[%s178 + $0x1f8] sm:$0xff]
        %v274 = vld [vmem:[#allocation2] sm:$0xff]
        %v275 = vld [vmem:[#allocation2 + $0x8] sm:$0xff]
        %v276 = vld [vmem:[#allocation2 + $0x10] sm:$0xff]
        %v277 = vld [vmem:[#allocation2 + $0x18] sm:$0xff]
        %v278 = vld [vmem:[#allocation3] sm:$0xff]
        %279 = vmatprep.subr.mxu0 %v211
        %280 = vmatpush1.msra.mxu0 %v210
        %281 = vmatprep.subr.mxu0 %v215
        %282 = vmatpush1.msra.mxu0 %v214
        %283 = vmatprep.subr.mxu0 %v219
        %284 = vmatpush1.msra.mxu0 %v218
        %285 = vmatprep.subr.mxu0 %v223
        %286 = vmatpush1.msra.mxu0 %v222
        %287 = vmatprep.subr.mxu0 %v227
        %288 = vmatpush1.msra.mxu0 %v226
        %289 = vmatprep.subr.mxu0 %v231
        %290 = vmatpush1.msra.mxu0 %v230
        %291 = vmatprep.subr.mxu0 %v235
        %292 = vmatpush1.msra.mxu0 %v234
        %293 = vmatprep.subr.mxu0 %v239
        %294 = vmatpush1.msra.mxu0 %v238
        %295 = vmatprep.subr.mxu0 %v243
        %296 = vmatpush1.msra.mxu0 %v242
        %297 = vmatprep.subr.mxu0 %v247
        %298 = vmatpush1.msra.mxu0 %v246
        %299 = vmatprep.subr.mxu0 %v251
        %300 = vmatpush1.msra.mxu0 %v250
        %301 = vmatprep.subr.mxu0 %v255
        %302 = vmatpush1.msra.mxu0 %v254
        %303 = vmatprep.subr.mxu0 %v259
        %304 = vmatpush1.msra.mxu0 %v258
        %305 = vmatprep.subr.mxu0 %v263
        %306 = vmatpush1.msra.mxu0 %v262
        %307 = vmatprep.subr.mxu0 %v267
        %308 = vmatpush1.msra.mxu0 %v266
        %309 = vmatprep.subr.mxu0 %v271
        %310 = vmatpush1.msra.mxu0 %v270
        %311 = vmatprep.subr.mxu0 0.0
        %312 = vmatpush1.msra.mxu0 0.0
        %313 = vmatprep.subr.mxu0 0.0
        %314 = vmatpush1.msra.mxu0 0.0
        %315 = vmatprep.subr.mxu0 0.0
        %316 = vmatpush1.msra.mxu0 0.0
        %317 = vmatprep.subr.mxu0 0.0
        %318 = vmatpush1.msra.mxu0 0.0
        %319 = vmatprep.subr.mxu0 0.0
        %320 = vmatpush1.msra.mxu0 0.0
        %321 = vmatprep.subr.mxu0 0.0
        %322 = vmatpush1.msra.mxu0 0.0
        %323 = vmatprep.subr.mxu0 0.0
        %324 = vmatpush1.msra.mxu0 0.0
        %325 = vmatprep.subr.mxu0 0.0
        %326 = vmatpush1.msra.mxu0 0.0
        %327 = vmatprep.subr.mxu0 0.0
        %328 = vmatpush1.msra.mxu0 0.0
        %329 = vmatprep.subr.mxu0 0.0
        %330 = vmatpush1.msra.mxu0 0.0
        %331 = vmatprep.subr.mxu0 0.0
        %332 = vmatpush1.msra.mxu0 0.0
        %333 = vmatprep.subr.mxu0 0.0
        %334 = vmatpush1.msra.mxu0 0.0
        %335 = vmatprep.subr.mxu0 0.0
        %336 = vmatpush1.msra.mxu0 0.0
        %337 = vmatprep.subr.mxu0 0.0
        %338 = vmatpush1.msra.mxu0 0.0
        %339 = vmatprep.subr.mxu0 0.0
        %340 = vmatpush1.msra.mxu0 0.0
        %341 = vmatprep.subr.mxu0 0.0
        %342 = vmatpush1.msra.mxu0 0.0
        %343 = vmatprep.mubr.f32.mxu0 0.0
        %344 = vmatmul.mubr.f32.gmra.mrb[0].mxu0 %v278
        %v345 = vpop.f32.mrb[0].mxu0
        %v346 = vadd.f32 0.0, %v345
        %v347 = vpop.f32.mrb[0].mxu0
        %v348 = vadd.f32 0.0, %v347
        %349 = vdwg.mxu0
        %350 = vmatprep.subr.mxu0 %v213
        %351 = vmatpush1.msra.mxu0 %v212
        %352 = vmatprep.subr.mxu0 %v217
        %353 = vmatpush1.msra.mxu0 %v216
        %354 = vmatprep.subr.mxu0 %v221
        %355 = vmatpush1.msra.mxu0 %v220
        %356 = vmatprep.subr.mxu0 %v225
        %357 = vmatpush1.msra.mxu0 %v224
        %358 = vmatprep.subr.mxu0 %v229
        %359 = vmatpush1.msra.mxu0 %v228
        %360 = vmatprep.subr.mxu0 %v233
        %361 = vmatpush1.msra.mxu0 %v232
        %362 = vmatprep.subr.mxu0 %v237
        %363 = vmatpush1.msra.mxu0 %v236
        %364 = vmatprep.subr.mxu0 %v241
        %365 = vmatpush1.msra.mxu0 %v240
        %366 = vmatprep.subr.mxu0 %v245
        %367 = vmatpush1.msra.mxu0 %v244
        %368 = vmatprep.subr.mxu0 %v249
        %369 = vmatpush1.msra.mxu0 %v248
        %370 = vmatprep.subr.mxu0 %v253
        %371 = vmatpush1.msra.mxu0 %v252
        %372 = vmatprep.subr.mxu0 %v257
        %373 = vmatpush1.msra.mxu0 %v256
        %374 = vmatprep.subr.mxu0 %v261
        %375 = vmatpush1.msra.mxu0 %v260
        %376 = vmatprep.subr.mxu0 %v265
        %377 = vmatpush1.msra.mxu0 %v264
        %378 = vmatprep.subr.mxu0 %v269
        %379 = vmatpush1.msra.mxu0 %v268
        %380 = vmatprep.subr.mxu0 %v273
        %381 = vmatpush1.msra.mxu0 %v272
        %382 = vmatprep.subr.mxu0 0.0
        %383 = vmatpush1.msra.mxu0 0.0
        %384 = vmatprep.subr.mxu0 0.0
        %385 = vmatpush1.msra.mxu0 0.0
        %386 = vmatprep.subr.mxu0 0.0
        %387 = vmatpush1.msra.mxu0 0.0
        %388 = vmatprep.subr.mxu0 0.0
        %389 = vmatpush1.msra.mxu0 0.0
        %390 = vmatprep.subr.mxu0 0.0
        %391 = vmatpush1.msra.mxu0 0.0
        %392 = vmatprep.subr.mxu0 0.0
        %393 = vmatpush1.msra.mxu0 0.0
        %394 = vmatprep.subr.mxu0 0.0
        %395 = vmatpush1.msra.mxu0 0.0
        %396 = vmatprep.subr.mxu0 0.0
        %397 = vmatpush1.msra.mxu0 0.0
        %398 = vmatprep.subr.mxu0 0.0
        %399 = vmatpush1.msra.mxu0 0.0
        %400 = vmatprep.subr.mxu0 0.0
        %401 = vmatpush1.msra.mxu0 0.0
        %402 = vmatprep.subr.mxu0 0.0
        %403 = vmatpush1.msra.mxu0 0.0
        %404 = vmatprep.subr.mxu0 0.0
        %405 = vmatpush1.msra.mxu0 0.0
        %406 = vmatprep.subr.mxu0 0.0
        %407 = vmatpush1.msra.mxu0 0.0
        %408 = vmatprep.subr.mxu0 0.0
        %409 = vmatpush1.msra.mxu0 0.0
        %410 = vmatprep.subr.mxu0 0.0
        %411 = vmatpush1.msra.mxu0 0.0
        %412 = vmatprep.subr.mxu0 0.0
        %413 = vmatpush1.msra.mxu0 0.0
        %414 = vmatprep.mubr.f32.mxu0 0.0
        %415 = vmatmul.mubr.f32.gmra.mrb[0].mxu0 %v278
        %v416 = vpop.f32.mrb[0].mxu0
        %v417 = vadd.f32 0.0, %v416
        %v418 = vpop.f32.mrb[0].mxu0
        %v419 = vadd.f32 0.0, %v418
        %420 = vdwg.mxu0
        %v421 = vadd.f32 %v274, %v346
        %v422 = vadd.f32 %v275, %v348
        %v423 = vadd.f32 %v276, %v417
        %v424 = vadd.f32 %v277, %v419
        %425 = vst [vmem:[#allocation2] sm:$0xff] %v421
        %426 = vst [vmem:[#allocation2 + $0x8] sm:$0xff] %v422
        %427 = vst [vmem:[#allocation2 + $0x10] sm:$0xff] %v423
        %428 = vst [vmem:[#allocation2 + $0x18] sm:$0xff] %v424
        // Predicated region
        $region41: #{tpu_custom_call.1} parent=27 // pred_check
          %p429 = pneg %p202
        $region42: #{tpu_custom_call.1} parent=27 // pred_check_branch
          %431 = sbr.rel (%p429) target = $region44
        $region43: #{tpu_custom_call.1} parent=27 // pred_region
          %v432 = vld [vmem:[#allocation2] sm:$0xff]
          %v433 = vld [vmem:[#allocation2 + $0x8] sm:$0xff]
          %v434 = vld [vmem:[#allocation2 + $0x10] sm:$0xff]
          %v435 = vld [vmem:[#allocation2 + $0x18] sm:$0xff]
          %v436 = vand.u32 2147483647, %v432
          %v437 = vand.u32 2147483647, %v433
          %v438 = vand.u32 2147483647, %v434
          %v439 = vand.u32 2147483647, %v435
          %440 = vst [vmem:[%s198] sm:$0xff] %v436
          %441 = vst [vmem:[%s198 + $0x8] sm:$0xff] %v437
          %442 = vst [vmem:[%s198 + $0x10] sm:$0xff] %v438
          %443 = vst [vmem:[%s198 + $0x18] sm:$0xff] %v439
        $region44: #{tpu_custom_call.1} parent=27 // pred_fallthru
          _
        %s444 = sand.u32 %s94, 1
        %s445 = scalar_lea.sflag [#allocation5], %s444
        %s446 = sand.u32 %s94, 1
        %s447 = smul.addr %s446, 32
        %s448 = scalar_lea.vmem [#allocation8], %s447
        // Predicated region
        $region45: #{tpu_custom_call.1} parent=27 // pred_check
          %p449 = pneg %p104
        $region46: #{tpu_custom_call.1} parent=27 // pred_check_branch
          %451 = sbr.rel (%p449) target = $region48
        $region47: #{tpu_custom_call.1} parent=27 // pred_region
          %s452 = smul.u32 4, %s24
          %s454 = ssub.s32 512, 512
          %455 = vsyncadd %s445, %s454
          %s456 = smul.addr %s452, 128
          %s457 = scalar_lea.hbm %s2, %s456
          %s459 = sshll.u32 %s448, 4
          %s460 = int_to_ptr.vmem [resolvable:$true] %s459
          %462 = dma.vmem_to_hbm [thread:$0]  %s460, 512, %s457, %s445
        $region48: #{tpu_custom_call.1} parent=27 // pred_fallthru
          _
      $region28: #{tpu_custom_call.1} parent=5 // pred_fallthru
        _
      %p463 = scmp.le.s32.totalorder 2, %s15
      // Predicated region
      $region49: #{tpu_custom_call.1} parent=5 // pred_check
        %p464 = pneg %p463
      $region50: #{tpu_custom_call.1} parent=5 // pred_check_branch
        %466 = sbr.rel (%p464) target = $region52
      $region51: #{tpu_custom_call.1} parent=5 // pred_region
        %s467 = ssub.s32 %s15, 2
        // Predicated region
        $region53: #{tpu_custom_call.1} parent=51 // pred_check
          %p468 = pneg %p110
        $region54: #{tpu_custom_call.1} parent=51 // pred_check_branch
          %470 = sbr.rel (%p468) target = $region56
        $region55: #{tpu_custom_call.1} parent=51 // pred_region
          %s471 = sand.u32 %s95, 1
          %s472 = scalar_lea.sflag [#allocation5], %s471
          %s473 = sand.u32 %s95, 1
          %s474 = smul.addr %s473, 32
          %s475 = scalar_lea.vmem [#allocation8], %s474
          %476 = dma.done %s472, 512
        $region56: #{tpu_custom_call.1} parent=51 // pred_fallthru
          _
      $region52: #{tpu_custom_call.1} parent=5 // pred_fallthru
        _
    $region6: #{tpu_custom_call.1} parent=1 // loop_footer
      %s19 = sadd.s32 1, %s15
    $region7: #{tpu_custom_call.1} parent=1 // loop_footer_branch
      %14 = sbr.rel target = $region3
    $region8: #{tpu_custom_call.1} parent=1 // loop_exit
      _
    %477 = vsyncpa [#allocation4], 1
    %s478 = scalar_lea.sflag [#allocation4], 1
    %479 = vsyncpa %s478, 1
    %480 = vsyncpa [#allocation7], 1
    %s481 = scalar_lea.sflag [#allocation7], 1
    %482 = vsyncpa %s481, 1
    %483 = vsyncpa [#allocation5], 1
    %s484 = scalar_lea.sflag [#allocation5], 1
    %485 = vsyncpa %s484, 1

</llo_original>
